<compile_context>
chip_gen: v5e
topology: v5e:2x2
jax: 0.10.0
libtpu: 0.0.40
codegen_flags: <defaults>
</compile_context>

<pallas_src>
import jax
import jax.numpy as jnp
from jax.experimental import pallas as pl
from jax.experimental.pallas import tpu as pltpu
from jax.scipy.linalg import block_diag

N_MODELS = 4
IN_DIM = 5
PAD_IN = 8            # layer-1 contraction dim, zero-padded to a sublane multiple
HID_DIM = 8
OUT_DIM = 1
BATCH = 8

MH = N_MODELS * HID_DIM   # 32 packed lanes

# Static, 8-aligned row offsets inside the parameter slab (96 rows x 32 lanes).
ROW_W1 = 0     # rows  0:8   -> w1 packed, zero-padded to (8, 32)
ROW_B1 = 8     # row   8     -> b1 packed (1, 32)
ROW_W2 = 16    # rows 16:48  -> w2 block-diagonal (32, 32)
ROW_B2 = 48    # row  48     -> b2 packed (1, 32)
ROW_W3 = 56    # rows 56:88  -> w3 folded-mean column in lane 0 (32, 32)
ROW_B3 = 88    # row  88     -> mean(b3) scalar in lane 0
SLAB_ROWS = 96


def _ensemble_kernel(x_ref, p_ref, o_ref):
    x = x_ref[...]                                    # (B, 8)  zero-padded inputs

    w1 = p_ref[ROW_W1:ROW_W1 + PAD_IN, :]             # (8, 32)
    b1 = p_ref[ROW_B1:ROW_B1 + 1, :]                  # (1, 32)
    w2 = p_ref[ROW_W2:ROW_W2 + MH, :]                 # (32, 32)
    b2 = p_ref[ROW_B2:ROW_B2 + 1, :]                  # (1, 32)
    w3 = p_ref[ROW_W3:ROW_W3 + MH, :]                 # (32, 32), only lane 0 live
    b3 = p_ref[ROW_B3:ROW_B3 + 1, 0:1]                # (1, 1) = mean(b3_m)

    # Layer 1 (all models at once): (B, 8) @ (8, 32) + (1, 32)
    h = jnp.tanh(jnp.dot(x, w1, preferred_element_type=jnp.float32) + b1)
    # Layer 2 (block-diagonal => per-model): (B, 32) @ (32, 32)
    h = jnp.tanh(jnp.dot(h, w2, preferred_element_type=jnp.float32) + b2)
    # Layer 3 with the ensemble mean folded into the weights:
    # lane 0 of y is already mean_m(model_m(x)) minus the bias term.
    y = jnp.dot(h, w3, preferred_element_type=jnp.float32)        # (B, 32)

    o_ref[...] = (y[:, 0:1] + b3).astype(o_ref.dtype)


def pack_params(p):
    """Pack all per-model weights into one (96, 32) f32 slab. Call ONCE at init."""
    M = p["w1"].shape[0]

    # (M, IN, HID) -> (IN, M*HID), model-major on the lane axis, rows padded 5->8.
    w1p = jnp.transpose(p["w1"], (1, 0, 2)).reshape(IN_DIM, MH)
    w1p = jnp.pad(w1p, ((0, PAD_IN - IN_DIM), (0, 0)))            # (8, 32)
    b1p = p["b1"].reshape(1, MH)                                   # (1, 32)
    w2p = block_diag(*[p["w2"][m] for m in range(M)])              # (32, 32)
    b2p = p["b2"].reshape(1, MH)                                   # (1, 32)
    # Fold the ensemble mean into layer 3: y = h @ (concat_m w3_m / M) + mean(b3_m).
    w3p = p["w3"].reshape(MH, OUT_DIM) / M                         # (32, 1)
    b3m = jnp.mean(p["b3"])                                        # scalar

    slab = jnp.zeros((SLAB_ROWS, MH), jnp.float32)
    slab = slab.at[ROW_W1:ROW_W1 + PAD_IN, :].set(w1p)
    slab = slab.at[ROW_B1:ROW_B1 + 1, :].set(b1p)
    slab = slab.at[ROW_W2:ROW_W2 + MH, :].set(w2p)
    slab = slab.at[ROW_B2:ROW_B2 + 1, :].set(b2p)
    slab = slab.at[ROW_W3:ROW_W3 + MH, 0:OUT_DIM].set(w3p)
    slab = slab.at[ROW_B3, 0].set(b3m)
    return slab


@jax.jit
def ensemble_forward(x, slab):
    """x: (B, IN_DIM) float32.  slab: packed params from pack_params() (cached)."""
    B = x.shape[0]
    x_pad = jnp.pad(x, ((0, 0), (0, PAD_IN - IN_DIM)))            # (B, 8), K aligned

    vmem = pl.BlockSpec(memory_space=pltpu.MemorySpace.VMEM)
    return pl.pallas_call(
        _ensemble_kernel,
        out_shape=jax.ShapeDtypeStruct((B, OUT_DIM), jnp.float32),
        in_specs=[vmem, vmem],
        out_specs=vmem,
    )(x_pad, slab)


def init_params(key):
    ks = jax.random.split(key, 6)
    scale = 0.3
    return {
        "w1": scale * jax.random.normal(ks[0], (N_MODELS, IN_DIM, HID_DIM), jnp.float32),
        "b1": scale * jax.random.normal(ks[1], (N_MODELS, 1, HID_DIM), jnp.float32),
        "w2": scale * jax.random.normal(ks[2], (N_MODELS, HID_DIM, HID_DIM), jnp.float32),
        "b2": scale * jax.random.normal(ks[3], (N_MODELS, 1, HID_DIM), jnp.float32),
        "w3": scale * jax.random.normal(ks[4], (N_MODELS, HID_DIM, OUT_DIM), jnp.float32),
        "b3": scale * jax.random.normal(ks[5], (N_MODELS, 1, OUT_DIM), jnp.float32),
    }


def reference_forward(x, p):
    # Exactly mirrors EnsembleModel.forward: per-model MLP, then mean.
    outs = []
    for m in range(N_MODELS):
        h = jnp.tanh(x @ p["w1"][m] + p["b1"][m])
        h = jnp.tanh(h @ p["w2"][m] + p["b2"][m])
        outs.append(h @ p["w3"][m] + p["b3"][m])
    return sum(outs) / len(outs)


if __name__ == "__main__":
    key = jax.random.PRNGKey(0)
    k_x, k_p = jax.random.split(key)
    x = jax.random.normal(k_x, (BATCH, IN_DIM), jnp.float32)
    params = init_params(k_p)

    # Pack once (off the per-call critical path); the forward only sees the slab.
    slab = jax.block_until_ready(pack_params(params))

    out = ensemble_forward(x, slab)
    out = jax.block_until_ready(out)

    ref = reference_forward(x, params)
    assert out.shape == (BATCH, OUT_DIM)
    assert jnp.allclose(out, ref, atol=1e-5, rtol=1e-5), (out, ref)

    print("KERNEL_OK")
</pallas_src>

<mosaic_0001>
module attributes {stable_mosaic.version = 11 : i64} {
  func.func @_ensemble_kernel(%arg0: memref<8x8xf32, #tpu.memory_space<vmem>>, %arg1: memref<96x32xf32, #tpu.memory_space<vmem>>, %arg2: memref<8x1xf32, #tpu.memory_space<vmem>>) attributes {dimension_semantics = [], scalar_prefetch = 0 : i64, scratch_operands = 0 : i64, tpu.core_type = #tpu.core_type<tc>} {
    %c0 = arith.constant 0 : index
    %c0_0 = arith.constant 0 : index
    %0 = vector.load %arg0[%c0, %c0_0] : memref<8x8xf32, #tpu.memory_space<vmem>>, vector<8x8xf32>
    %c0_1 = arith.constant 0 : index
    %c0_2 = arith.constant 0 : index
    %1 = vector.load %arg1[%c0_1, %c0_2] : memref<96x32xf32, #tpu.memory_space<vmem>>, vector<8x32xf32>
    %c8 = arith.constant 8 : index
    %c0_3 = arith.constant 0 : index
    %2 = vector.load %arg1[%c8, %c0_3] : memref<96x32xf32, #tpu.memory_space<vmem>>, vector<1x32xf32>
    %c16 = arith.constant 16 : index
    %c0_4 = arith.constant 0 : index
    %3 = vector.load %arg1[%c16, %c0_4] : memref<96x32xf32, #tpu.memory_space<vmem>>, vector<32x32xf32>
    %c48 = arith.constant 48 : index
    %c0_5 = arith.constant 0 : index
    %4 = vector.load %arg1[%c48, %c0_5] : memref<96x32xf32, #tpu.memory_space<vmem>>, vector<1x32xf32>
    %c56 = arith.constant 56 : index
    %c0_6 = arith.constant 0 : index
    %5 = vector.load %arg1[%c56, %c0_6] : memref<96x32xf32, #tpu.memory_space<vmem>>, vector<32x32xf32>
    %c88 = arith.constant 88 : index
    %c0_7 = arith.constant 0 : index
    %6 = vector.load %arg1[%c88, %c0_7] : memref<96x32xf32, #tpu.memory_space<vmem>>, vector<1x1xf32>
    %cst = arith.constant dense<0.000000e+00> : vector<8x32xf32>
    %7 = tpu.matmul %0, %1, %cst {dimension_numbers = #tpu.dot_dimension_numbers<[1], [0], [0], [1], [0, 0, 1, 1], [], []>} : vector<8x8xf32>, vector<8x32xf32>, vector<8x32xf32> -> vector<8x32xf32>
    %8 = vector.broadcast %2 : vector<1x32xf32> to vector<8x32xf32>
    %9 = arith.addf %7, %8 : vector<8x32xf32>
    %10 = math.tanh %9 : vector<8x32xf32>
    %cst_8 = arith.constant dense<0.000000e+00> : vector<8x32xf32>
    %11 = tpu.matmul %10, %3, %cst_8 {dimension_numbers = #tpu.dot_dimension_numbers<[1], [0], [0], [1], [0, 0, 1, 1], [], []>} : vector<8x32xf32>, vector<32x32xf32>, vector<8x32xf32> -> vector<8x32xf32>
    %12 = vector.broadcast %4 : vector<1x32xf32> to vector<8x32xf32>
    %13 = arith.addf %11, %12 : vector<8x32xf32>
    %14 = math.tanh %13 : vector<8x32xf32>
    %cst_9 = arith.constant dense<0.000000e+00> : vector<8x32xf32>
    %15 = tpu.matmul %14, %5, %cst_9 {dimension_numbers = #tpu.dot_dimension_numbers<[1], [0], [0], [1], [0, 0, 1, 1], [], []>} : vector<8x32xf32>, vector<32x32xf32>, vector<8x32xf32> -> vector<8x32xf32>
    %16 = vector.extract_strided_slice %15 {offsets = [0, 0], sizes = [8, 1], strides = [1, 1]} : vector<8x32xf32> to vector<8x1xf32>
    %17 = vector.broadcast %6 : vector<1x1xf32> to vector<8x1xf32>
    %18 = arith.addf %16, %17 : vector<8x1xf32>
    %c0_10 = arith.constant 0 : index
    %c0_11 = arith.constant 0 : index
    %19 = vector.load %arg2[%c0_10, %c0_11] : memref<8x1xf32, #tpu.memory_space<vmem>>, vector<8x1xf32>
    tpu.vector_store %arg2[%c0_10, %c0_11], %18 {strides = array<i32>} : memref<8x1xf32, #tpu.memory_space<vmem>>, vector<8x1xf32>,
    return
  }
}

</mosaic_0001>

<llo_original>
// kernel: ensemble_forward.1
$region0: #{ensemble_forward.1}
  #allocation0 [shape = 'u32[]', space=smem, size = 0x4, offset = 0x4, fixed_abs, tag = 'smem constant byte address 0x4 - core index']
  #allocation1 [shape = 'u32[72,128]{1,0:T(1,128)}', space=vmem, size = 0x9000, scoped, tag = 'internal scratch']
  %s0 = inlined_call_operand.vmem [shape: f32[8,8], index: 0, kind: input, shape index: {}]
  %s1 = inlined_call_operand.vmem [shape: f32[96,32], index: 1, kind: input, shape index: {}]
  %s2 = inlined_call_operand.vmem [shape: f32[8,1], index: 2, kind: output, shape index: {}]
  %s3 = sld [smem:[#allocation0]]
  $region18: #{ensemble_forward.1} parent=0
    _
  %s5 = ssub.s32 1, %s3
  %s6 = scalar_select 0, %s5, %s3
  // Predicated region
  $region2: #{ensemble_forward.1} parent=0 // pred_check
    _
  $region3: #{ensemble_forward.1} parent=0 // pred_check_branch
    %8 = sbr.rel (0) target = $region5
  $region4: #{ensemble_forward.1} parent=0 // pred_region
    _
  $region5: #{ensemble_forward.1} parent=0 // pred_fallthru
    _
  // Predicated region
  $region6: #{ensemble_forward.1} parent=0 // pred_check
    _
  $region7: #{ensemble_forward.1} parent=0 // pred_check_branch
    %10 = sbr.rel (0) target = $region9
  $region8: #{ensemble_forward.1} parent=0 // pred_region
    _
  $region9: #{ensemble_forward.1} parent=0 // pred_fallthru
    _
  %v11 = vld [vmem:[%s0] sm:$0xff]
  %v12 = vld [vmem:[%s1] sm:$0xff]
  %v13 = vld [vmem:[%s1 + $0x8] sm:$0x1]
  %v14 = vld [vmem:[%s1 + $0x10] sm:$0xff]
  %v15 = vld [vmem:[%s1 + $0x18] sm:$0xff]
  %v16 = vld [vmem:[%s1 + $0x20] sm:$0xff]
  %v17 = vld [vmem:[%s1 + $0x28] sm:$0xff]
  %v18 = vld [vmem:[%s1 + $0x30] sm:$0x1]
  %v19 = vld [vmem:[%s1 + $0x38] sm:$0xff]
  %v20 = vld [vmem:[%s1 + $0x40] sm:$0xff]
  %v21 = vld [vmem:[%s1 + $0x48] sm:$0xff]
  %v22 = vld [vmem:[%s1 + $0x50] sm:$0xff]
  %v23 = vld [vmem:[%s1 + $0x58] sm:$0x1]
  %v24 = vperm.slane %v13, 0
  %vm25 = vcmask 64512
  %v27 = vsel %vm25, %v11, 0
  %29 = vmatpush.msra.mxu0 0.0
  %30 = vmatpush.msra.mxu0 0.0
  %31 = vmatpush.msra.mxu0 0.0
  %32 = vmatpush.msra.mxu0 0.0
  %33 = vmatpush.msra.mxu0 0.0
  %34 = vmatpush.msra.mxu0 0.0
  %35 = vmatpush.msra.mxu0 0.0
  %36 = vmatpush.msra.mxu0 0.0
  %37 = vmatpush.msra.mxu0 0.0
  %38 = vmatpush.msra.mxu0 0.0
  %39 = vmatpush.msra.mxu0 0.0
  %40 = vmatpush.msra.mxu0 0.0
  %41 = vmatpush.msra.mxu0 0.0
  %42 = vmatpush.msra.mxu0 0.0
  %43 = vmatpush.msra.mxu0 0.0
  %44 = vmatpush.msra.mxu0 %v12
  %45 = vmatmul.f32.gmra.mxu0 %v27
  %v46 = vpop.f32.mrf.mxu0
  %v47 = vadd.f32 %v24, %v46
  %48 = vdwg.mxu0
  %v49 = vtanh.pop %v47
  %v50 = vperm.slane %v18, 0
  %vm51 = vcmask 261120
  %v53 = vsel %vm51, %v49, 0
  %55 = vmatpush.msra.mxu0 0.0
  %56 = vmatpush.msra.mxu0 0.0
  %57 = vmatpush.msra.mxu0 0.0
  %58 = vmatpush.msra.mxu0 0.0
  %59 = vmatpush.msra.mxu0 0.0
  %60 = vmatpush.msra.mxu0 0.0
  %61 = vmatpush.msra.mxu0 0.0
  %62 = vmatpush.msra.mxu0 0.0
  %63 = vmatpush.msra.mxu0 0.0
  %64 = vmatpush.msra.mxu0 0.0
  %65 = vmatpush.msra.mxu0 0.0
  %66 = vmatpush.msra.mxu0 0.0
  %67 = vmatpush.msra.mxu0 %v17
  %68 = vmatpush.msra.mxu0 %v16
  %69 = vmatpush.msra.mxu0 %v15
  %70 = vmatpush.msra.mxu0 %v14
  %71 = vmatmul.f32.gmra.mxu0 %v53
  %v72 = vpop.f32.mrf.mxu0
  %v73 = vadd.f32 %v50, %v72
  %74 = vdwg.mxu0
  %v75 = vtanh.pop %v73
  %v77 = vsel %vm51, %v75, 0
  %79 = vmatpush.msra.mxu0 0.0
  %80 = vmatpush.msra.mxu0 0.0
  %81 = vmatpush.msra.mxu0 0.0
  %82 = vmatpush.msra.mxu0 0.0
  %83 = vmatpush.msra.mxu0 0.0
  %84 = vmatpush.msra.mxu0 0.0
  %85 = vmatpush.msra.mxu0 0.0
  %86 = vmatpush.msra.mxu0 0.0
  %87 = vmatpush.msra.mxu0 0.0
  %88 = vmatpush.msra.mxu0 0.0
  %89 = vmatpush.msra.mxu0 0.0
  %90 = vmatpush.msra.mxu0 0.0
  %91 = vmatpush.msra.mxu0 %v22
  %92 = vmatpush.msra.mxu0 %v21
  %93 = vmatpush.msra.mxu0 %v20
  %94 = vmatpush.msra.mxu0 %v19
  %95 = vmatmul.f32.gmra.mxu0 %v77
  %v96 = vpop.f32.mrf.mxu0
  %v97 = vadd.f32 0.0, %v96
  %98 = vdwg.mxu0
  %v99 = vperm.slane %v23, 0
  %v100 = vadd.f32 %v97, %v99
  %vm101 = vcmask 7168
  %102 = vst.msk [vmem:[%s2] sm:$0xff] %vm101, %v100
  // Predicated region
  $region10: #{ensemble_forward.1} parent=0 // pred_check
    _
  $region11: #{ensemble_forward.1} parent=0 // pred_check_branch
    %104 = sbr.rel (0) target = $region13
  $region12: #{ensemble_forward.1} parent=0 // pred_region
    _
  $region13: #{ensemble_forward.1} parent=0 // pred_fallthru
    _
  // Predicated region
  $region14: #{ensemble_forward.1} parent=0 // pred_check
    _
  $region15: #{ensemble_forward.1} parent=0 // pred_check_branch
    %106 = sbr.rel (0) target = $region17
  $region16: #{ensemble_forward.1} parent=0 // pred_region
    _
  $region17: #{ensemble_forward.1} parent=0 // pred_fallthru
    _

</llo_original>
